<compile_context>
chip_gen: v7x
topology: tpu7x:2x2x1
jax: 0.10.0
libtpu: 0.0.40
codegen_flags: <defaults>
</compile_context>

<pallas_src>
import functools
import math

import jax
import jax.numpy as jnp
from jax import lax
from jax.experimental import pallas as pl
from jax.experimental.pallas import tpu as pltpu


# dot_general dimension numbers: contract dim-1 of both 2-D operands,
# i.e. (M, K) x (N, K) -> (M, N)  ==  A @ B.T  without a materialized transpose.
_CONTRACT_LAST = (((1,), (1,)), ((), ()))


def _copy_attention_kernel(hs_ref, q_ref,
                           wq_ref, bq_ref,
                           wk_ref, bk_ref,
                           wv_ref, bv_ref,
                           ctx_ref, probs_ref,
                           k_scr, v_scr,
                           *, inv_sqrt_h, compute_dtype):
    # grid = (batch, q_tile); batch is "parallel", q_tile is "arbitrary".
    qi = pl.program_id(1)

    # --- K/V projections hoisted: once per batch element, at the first q-tile,
    # --- into single-buffered VMEM scratch reused by all later q-tiles.
    @pl.when(qi == 0)
    def _project_kv():
        hs = hs_ref[0].astype(compute_dtype)                       # (Sk, H) bf16
        k_l = lax.dot_general(hs, wk_ref[...], _CONTRACT_LAST,
                              preferred_element_type=jnp.float32) + bk_ref[...]
        v_l = lax.dot_general(hs, wv_ref[...], _CONTRACT_LAST,
                              preferred_element_type=jnp.float32) + bv_ref[...]
        k_scr[...] = k_l.astype(compute_dtype)
        v_scr[...] = v_l.astype(compute_dtype)

    # --- Q projection for this q-tile; fold the 1/sqrt(H) scale into q_l
    # --- (TQ*H elements) instead of scaling the TQ*Sk scores matrix.
    q = q_ref[0].astype(compute_dtype)                             # (TQ, H) bf16
    q_l = lax.dot_general(q, wq_ref[...], _CONTRACT_LAST,
                          preferred_element_type=jnp.float32) + bq_ref[...]
    q_l = (q_l * inv_sqrt_h).astype(compute_dtype)

    # --- scores = q_l @ k_l.T, expressed without an explicit transpose.
    scores = lax.dot_general(q_l, k_scr[...], _CONTRACT_LAST,
                             preferred_element_type=jnp.float32)   # (TQ, Sk) f32

    # exp(log_softmax(x)) == softmax(x); keep the elementwise math in f32
    # on the VPU (v5e has no bf16 VPU/EUP).  Sk is fully resident, so no
    # padded-key masking is required.
    m = jnp.max(scores, axis=-1, keepdims=True)
    e = jnp.exp(scores - m)
    denom = jnp.sum(e, axis=-1, keepdims=True)
    probs = e * pl.reciprocal(denom, approx=True)                  # EUP slot

    # TODO(synk): nn.Dropout on probs is identity in eval mode; training-mode
    # dropout (pltpu.prng_random_bits mask + rescale) is not implemented.

    ctx = jnp.dot(probs.astype(compute_dtype), v_scr[...],
                  preferred_element_type=jnp.float32)              # (TQ, H) f32

    ctx_ref[0] = ctx.astype(ctx_ref.dtype)
    probs_ref[0] = probs.astype(probs_ref.dtype)


def _vmem_estimate(sk, tq, h, in_dtype, compute_dtype, probs_dtype):
    """Rough per-core VMEM budget (bytes) used to set vmem_limit_bytes."""
    in_b = jnp.dtype(in_dtype).itemsize
    c_b = jnp.dtype(compute_dtype).itemsize
    p_b = jnp.dtype(probs_dtype).itemsize
    streamed = 2 * (sk * h * in_b        # hidden_states block (double-buffered)
                    + tq * h * in_b      # query tile
                    + tq * h * in_b      # context tile
                    + tq * sk * p_b)     # probs tile
    # Weights/biases: constant index_map -> fetched once, but the pipeline keeps
    # two buffers.  (pipeline_mode=pl.Buffered(1) / manual staging would halve
    # this; left double-buffered here for portability.)
    weights = 2 * 3 * (h * h + h) * c_b
    scratch = 2 * sk * h * c_b           # hoisted K/V projections (single buffer)
    live_f32 = 4 * (tq * sk + 2 * tq * h)  # scores/probs + q_l f32 temporaries
    return streamed + weights + scratch + live_f32


def copy_attention(hidden_states, query, params, *, q_tile=None,
                   compute_dtype=jnp.bfloat16, probs_dtype=None):
    """hidden_states: (B, Sk, H), query: (B, Sq, H). Returns (context, probs)."""
    B, Sk, H = hidden_states.shape
    Bq, Sq, Hq = query.shape
    assert Bq == B and Hq == H

    if probs_dtype is None:
        # Match the module: probs dtype follows the activation dtype
        # (bf16 inputs -> bf16 probs, which also halves HBM writeback).
        probs_dtype = hidden_states.dtype

    # Pick a query tile: full Sq for short sequences, otherwise a lane/MXU
    # friendly tile that divides Sq.  Block sublane dim must be a multiple of 8
    # or equal to the full dim.
    if q_tile is None:
        q_tile = Sq
        for t in (512, 256, 128):
            if Sq % t == 0:
                q_tile = t
                break
    assert Sq % q_tile == 0 and (q_tile == Sq or q_tile % 8 == 0)
    num_q_tiles = Sq // q_tile

    # nn.Linear weights are (out, in); pass them UNTRANSPOSED (the kernel
    # contracts the last dims directly) and cast once to the MXU compute dtype.
    wq = params["wq"].astype(compute_dtype)
    wk = params["wk"].astype(compute_dtype)
    wv = params["wv"].astype(compute_dtype)
    bq = params["bq"].reshape(1, H).astype(jnp.float32)
    bk = params["bk"].reshape(1, H).astype(jnp.float32)
    bv = params["bv"].reshape(1, H).astype(jnp.float32)

    weight_spec = pl.BlockSpec((H, H), lambda b, qi: (0, 0))
    bias_spec = pl.BlockSpec((1, H), lambda b, qi: (0, 0))

    grid_spec = pltpu.PrefetchScalarGridSpec(
        num_scalar_prefetch=0,
        grid=(B, num_q_tiles),
        in_specs=[
            pl.BlockSpec((1, Sk, H), lambda b, qi: (b, 0, 0)),       # hidden_states
            pl.BlockSpec((1, q_tile, H), lambda b, qi: (b, qi, 0)),  # query tile
            weight_spec, bias_spec,                                  # Wq, bq
            weight_spec, bias_spec,                                  # Wk, bk
            weight_spec, bias_spec,                                  # Wv, bv
        ],
        out_specs=[
            pl.BlockSpec((1, q_tile, H), lambda b, qi: (b, qi, 0)),  # context
            pl.BlockSpec((1, q_tile, Sk), lambda b, qi: (b, qi, 0)), # probs (full, lane-dense Sk)
        ],
        scratch_shapes=[
            pltpu.VMEM((Sk, H), compute_dtype),   # hoisted K projection
            pltpu.VMEM((Sk, H), compute_dtype),   # hoisted V projection
        ],
    )

    # VMEM budget: never below the 32 MiB scoped default, capped at the 64 MiB
    # physical VMEM of v7x (v5e/v6e have 128 MiB, so this cap is always safe).
    est = _vmem_estimate(Sk, q_tile, H, hidden_states.dtype, compute_dtype, probs_dtype)
    vmem_limit = int(min(max(32 * 1024 * 1024, 2 * est), 64 * 1024 * 1024))

    kernel = functools.partial(
        _copy_attention_kernel,
        inv_sqrt_h=1.0 / math.sqrt(H),
        compute_dtype=compute_dtype,
    )

    ctx, probs = pl.pallas_call(
        kernel,
        out_shape=(
            jax.ShapeDtypeStruct((B, Sq, H), hidden_states.dtype),
            jax.ShapeDtypeStruct((B, Sq, Sk), probs_dtype),
        ),
        grid_spec=grid_spec,
        compiler_params=pltpu.CompilerParams(
            # batch axis "parallel" (megacore shards it on v7x when B >= 2);
            # q-tile axis must be "arbitrary" because the K/V scratch computed
            # at q-tile 0 is reused by the following q-tiles of the same batch.
            dimension_semantics=("parallel", "arbitrary"),
            vmem_limit_bytes=vmem_limit,
        ),
    )(hidden_states, query, wq, bq, wk, bk, wv, bv)
    return ctx, probs


def init_params(key, hidden_size):
    """Deterministic init matching the module: Xavier-uniform weights, zero biases."""
    kq, kk, kv = jax.random.split(key, 3)
    bound = math.sqrt(6.0 / (hidden_size + hidden_size))  # xavier_uniform_, gain=1

    def w(k):
        return jax.random.uniform(k, (hidden_size, hidden_size),
                                  minval=-bound, maxval=bound, dtype=jnp.float32)

    zeros = jnp.zeros((hidden_size,), jnp.float32)
    return {"wq": w(kq), "bq": zeros,
            "wk": w(kk), "bk": zeros,
            "wv": w(kv), "bv": zeros}


def _reference(hidden_states, query, params, compute_dtype=jnp.float32):
    """Pure-JAX reference. compute_dtype=f32 reproduces the PyTorch module
    exactly; compute_dtype=bf16 mirrors the kernel's MXU-operand casts
    (f32 accumulation), for a matched-precision comparison."""
    cd = compute_dtype
    f32 = jnp.float32
    H = query.shape[-1]

    def proj(x, w, b):
        y = lax.dot_general(x.astype(cd), w.astype(cd),
                            (((x.ndim - 1,), (1,)), ((), ())),
                            preferred_element_type=f32)
        return y + b

    q_l = (proj(query, params["wq"], params["bq"]) / math.sqrt(H)).astype(cd)
    k_l = proj(hidden_states, params["wk"], params["bk"]).astype(cd)
    v_l = proj(hidden_states, params["wv"], params["bv"]).astype(cd)
    scores = jnp.einsum("bqh,bkh->bqk", q_l, k_l, preferred_element_type=f32)
    probs = jax.nn.softmax(scores.astype(f32), axis=-1)
    ctx = jnp.einsum("bqk,bkh->bqh", probs.astype(cd), v_l,
                     preferred_element_type=f32)
    return ctx, probs


if __name__ == "__main__":
    # Small shapes; Sq=16 with q_tile=8 exercises the tiled path where the
    # hoisted K/V scratch is reused across multiple q-tiles of a batch element.
    B, Sq, Sk, H = 2, 16, 8, 32
    key = jax.random.PRNGKey(0)
    k_hs, k_q, k_p = jax.random.split(key, 3)

    hidden_states = jax.random.normal(k_hs, (B, Sk, H), dtype=jnp.float32)
    query = jax.random.normal(k_q, (B, Sq, H), dtype=jnp.float32)
    params = init_params(k_p, H)

    ctx, probs = copy_attention(hidden_states, query, params, q_tile=8)
    jax.block_until_ready((ctx, probs))

    # Matched-precision reference (same bf16 operand casts, f32 accumulation):
    # tight check of the kernel's math.
    ctx_m, probs_m = _reference(hidden_states, query, params,
                                compute_dtype=jnp.bfloat16)
    assert jnp.allclose(ctx, ctx_m, atol=2e-2, rtol=2e-2), "ctx vs matched-precision ref"
    assert jnp.allclose(probs, probs_m, atol=1e-2, rtol=1e-2), "probs vs matched-precision ref"

    # Loose sanity check against the pure-f32 (PyTorch-semantics) reference;
    # the gap is only bf16 quantization of the MXU operands.
    ctx_f, probs_f = _reference(hidden_states, query, params)
    assert jnp.allclose(ctx, ctx_f, atol=3e-1, rtol=1e-1), "ctx vs f32 ref (sanity)"
    assert jnp.allclose(probs, probs_f, atol=1e-1), "probs vs f32 ref (sanity)"

    print("KERNEL_OK")
</pallas_src>

<mosaic_0001>
module attributes {stable_mosaic.version = 11 : i64} {
  func.func @_copy_attention_kernel(%arg0: i32, %arg1: i32, %arg2: memref<1x8x32xf32, #tpu.memory_space<vmem>>, %arg3: memref<1x8x32xf32, #tpu.memory_space<vmem>>, %arg4: memref<32x32xbf16, #tpu.memory_space<vmem>>, %arg5: memref<1x32xf32, #tpu.memory_space<vmem>>, %arg6: memref<32x32xbf16, #tpu.memory_space<vmem>>, %arg7: memref<1x32xf32, #tpu.memory_space<vmem>>, %arg8: memref<32x32xbf16, #tpu.memory_space<vmem>>, %arg9: memref<1x32xf32, #tpu.memory_space<vmem>>, %arg10: memref<1x8x32xf32, #tpu.memory_space<vmem>>, %arg11: memref<1x8x8xf32, #tpu.memory_space<vmem>>, %arg12: memref<8x32xbf16, #tpu.memory_space<vmem>>, %arg13: memref<8x32xbf16, #tpu.memory_space<vmem>>) attributes {dimension_semantics = [#tpu.dimension_semantics<parallel>, #tpu.dimension_semantics<arbitrary>], iteration_bounds = array<i64: 2, 2>, scalar_prefetch = 0 : i64, scratch_operands = 2 : i64, tpu.core_type = #tpu.core_type<tc>, window_params = [{transform_indices = @transform_0, window_bounds = array<i64: 1, 8, 32>}, {transform_indices = @transform_1, window_bounds = array<i64: 1, 8, 32>}, {pipeline_mode = #tpu.pipeline_mode<synchronous>, transform_indices = @transform_2, window_bounds = array<i64: 32, 32>}, {pipeline_mode = #tpu.pipeline_mode<synchronous>, transform_indices = @transform_3, window_bounds = array<i64: 1, 32>}, {pipeline_mode = #tpu.pipeline_mode<synchronous>, transform_indices = @transform_4, window_bounds = array<i64: 32, 32>}, {pipeline_mode = #tpu.pipeline_mode<synchronous>, transform_indices = @transform_5, window_bounds = array<i64: 1, 32>}, {pipeline_mode = #tpu.pipeline_mode<synchronous>, transform_indices = @transform_6, window_bounds = array<i64: 32, 32>}, {pipeline_mode = #tpu.pipeline_mode<synchronous>, transform_indices = @transform_7, window_bounds = array<i64: 1, 32>}, {transform_indices = @transform_8, window_bounds = array<i64: 1, 8, 32>}, {transform_indices = @transform_9, window_bounds = array<i64: 1, 8, 8>}]} {
    %c0_i32 = arith.constant 0 : i32
    %0 = arith.cmpi eq, %arg1, %c0_i32 : i32
    %1 = arith.extui %0 : i1 to i32
    %c0_i32_0 = arith.constant 0 : i32
    %2 = arith.cmpi ne, %1, %c0_i32_0 : i32
    scf.if %2 {
      %c0_22 = arith.constant 0 : index
      %c0_23 = arith.constant 0 : index
      %c0_24 = arith.constant 0 : index
      %35 = vector.load %arg2[%c0_22, %c0_23, %c0_24] : memref<1x8x32xf32, #tpu.memory_space<vmem>>, vector<1x8x32xf32>
      %36 = vector.shape_cast %35 : vector<1x8x32xf32> to vector<8x32xf32>
      %37 = arith.truncf %36 : vector<8x32xf32> to vector<8x32xbf16>
      %c0_25 = arith.constant 0 : index
      %c0_26 = arith.constant 0 : index
      %38 = vector.load %arg6[%c0_25, %c0_26] : memref<32x32xbf16, #tpu.memory_space<vmem>>, vector<32x32xbf16>
      %cst_27 = arith.constant dense<0.000000e+00> : vector<8x32xf32>
      %39 = tpu.matmul %37, %38, %cst_27 {dimension_numbers = #tpu.dot_dimension_numbers<[1], [1], [0], [0], [0, 0, 1, 0], [], []>} : vector<8x32xbf16>, vector<32x32xbf16>, vector<8x32xf32> -> vector<8x32xf32>
      %c0_28 = arith.constant 0 : index
      %c0_29 = arith.constant 0 : index
      %40 = vector.load %arg7[%c0_28, %c0_29] : memref<1x32xf32, #tpu.memory_space<vmem>>, vector<1x32xf32>
      %41 = vector.broadcast %40 : vector<1x32xf32> to vector<8x32xf32>
      %42 = arith.addf %39, %41 : vector<8x32xf32>
      %c0_30 = arith.constant 0 : index
      %c0_31 = arith.constant 0 : index
      %43 = vector.load %arg8[%c0_30, %c0_31] : memref<32x32xbf16, #tpu.memory_space<vmem>>, vector<32x32xbf16>
      %cst_32 = arith.constant dense<0.000000e+00> : vector<8x32xf32>
      %44 = tpu.matmul %37, %43, %cst_32 {dimension_numbers = #tpu.dot_dimension_numbers<[1], [1], [0], [0], [0, 0, 1, 0], [], []>} : vector<8x32xbf16>, vector<32x32xbf16>, vector<8x32xf32> -> vector<8x32xf32>
      %c0_33 = arith.constant 0 : index
      %c0_34 = arith.constant 0 : index
      %45 = vector.load %arg9[%c0_33, %c0_34] : memref<1x32xf32, #tpu.memory_space<vmem>>, vector<1x32xf32>
      %46 = vector.broadcast %45 : vector<1x32xf32> to vector<8x32xf32>
      %47 = arith.addf %44, %46 : vector<8x32xf32>
      %48 = arith.truncf %42 : vector<8x32xf32> to vector<8x32xbf16>
      %c0_35 = arith.constant 0 : index
      %c0_36 = arith.constant 0 : index
      %49 = vector.load %arg12[%c0_35, %c0_36] : memref<8x32xbf16, #tpu.memory_space<vmem>>, vector<8x32xbf16>
      tpu.vector_store %arg12[%c0_35, %c0_36], %48 {strides = array<i32>} : memref<8x32xbf16, #tpu.memory_space<vmem>>, vector<8x32xbf16>,
      %50 = arith.truncf %47 : vector<8x32xf32> to vector<8x32xbf16>
      %c0_37 = arith.constant 0 : index
      %c0_38 = arith.constant 0 : index
      %51 = vector.load %arg13[%c0_37, %c0_38] : memref<8x32xbf16, #tpu.memory_space<vmem>>, vector<8x32xbf16>
      tpu.vector_store %arg13[%c0_37, %c0_38], %50 {strides = array<i32>} : memref<8x32xbf16, #tpu.memory_space<vmem>>, vector<8x32xbf16>,
    } else {
    }
    %c0 = arith.constant 0 : index
    %c0_1 = arith.constant 0 : index
    %c0_2 = arith.constant 0 : index
    %3 = vector.load %arg3[%c0, %c0_1, %c0_2] : memref<1x8x32xf32, #tpu.memory_space<vmem>>, vector<1x8x32xf32>
    %4 = vector.shape_cast %3 : vector<1x8x32xf32> to vector<8x32xf32>
    %5 = arith.truncf %4 : vector<8x32xf32> to vector<8x32xbf16>
    %c0_3 = arith.constant 0 : index
    %c0_4 = arith.constant 0 : index
    %6 = vector.load %arg4[%c0_3, %c0_4] : memref<32x32xbf16, #tpu.memory_space<vmem>>, vector<32x32xbf16>
    %cst = arith.constant dense<0.000000e+00> : vector<8x32xf32>
    %7 = tpu.matmul %5, %6, %cst {dimension_numbers = #tpu.dot_dimension_numbers<[1], [1], [0], [0], [0, 0, 1, 0], [], []>} : vector<8x32xbf16>, vector<32x32xbf16>, vector<8x32xf32> -> vector<8x32xf32>
    %c0_5 = arith.constant 0 : index
    %c0_6 = arith.constant 0 : index
    %8 = vector.load %arg5[%c0_5, %c0_6] : memref<1x32xf32, #tpu.memory_space<vmem>>, vector<1x32xf32>
    %9 = vector.broadcast %8 : vector<1x32xf32> to vector<8x32xf32>
    %10 = arith.addf %7, %9 : vector<8x32xf32>
    %cst_7 = arith.constant 0.176776692 : f32
    %11 = vector.broadcast %cst_7 : f32 to vector<8x32xf32>
    %12 = arith.mulf %10, %11 : vector<8x32xf32>
    %13 = arith.truncf %12 : vector<8x32xf32> to vector<8x32xbf16>
    %c0_8 = arith.constant 0 : index
    %c0_9 = arith.constant 0 : index
    %14 = vector.load %arg12[%c0_8, %c0_9] : memref<8x32xbf16, #tpu.memory_space<vmem>>, vector<8x32xbf16>
    %cst_10 = arith.constant dense<0.000000e+00> : vector<8x8xf32>
    %15 = tpu.matmul %13, %14, %cst_10 {dimension_numbers = #tpu.dot_dimension_numbers<[1], [1], [0], [0], [0, 0, 1, 0], [], []>} : vector<8x32xbf16>, vector<8x32xbf16>, vector<8x8xf32> -> vector<8x8xf32>
    %cst_11 = arith.constant dense<0xFF800000> : vector<8xf32>
    %16 = vector.multi_reduction <maximumf>, %15, %cst_11 [1] : vector<8x8xf32> to vector<8xf32>
    %17 = vector.shape_cast %16 : vector<8xf32> to vector<8x1xf32>
    %18 = vector.broadcast %17 : vector<8x1xf32> to vector<8x8xf32>
    %19 = arith.subf %15, %18 : vector<8x8xf32>
    %20 = math.exp %19 : vector<8x8xf32>
    %cst_12 = arith.constant dense<0.000000e+00> : vector<8xf32>
    %21 = vector.multi_reduction <add>, %20, %cst_12 [1] : vector<8x8xf32> to vector<8xf32>
    %22 = vector.shape_cast %21 : vector<8xf32> to vector<8x1xf32>
    %23 = tpu.reciprocal %22 {approx = true} : vector<8x1xf32> -> vector<8x1xf32>
    %24 = vector.broadcast %23 : vector<8x1xf32> to vector<8x8xf32>
    %25 = arith.mulf %20, %24 : vector<8x8xf32>
    %26 = arith.truncf %25 : vector<8x8xf32> to vector<8x8xbf16>
    %c0_13 = arith.constant 0 : index
    %c0_14 = arith.constant 0 : index
    %27 = vector.load %arg13[%c0_13, %c0_14] : memref<8x32xbf16, #tpu.memory_space<vmem>>, vector<8x32xbf16>
    %cst_15 = arith.constant dense<0.000000e+00> : vector<8x32xf32>
    %28 = tpu.matmul %26, %27, %cst_15 {dimension_numbers = #tpu.dot_dimension_numbers<[1], [0], [0], [1], [0, 0, 1, 1], [], []>} : vector<8x8xbf16>, vector<8x32xbf16>, vector<8x32xf32> -> vector<8x32xf32>
    %c0_16 = arith.constant 0 : index
    %c0_17 = arith.constant 0 : index
    %c0_18 = arith.constant 0 : index
    %29 = vector.load %arg10[%c0_16, %c0_17, %c0_18] : memref<1x8x32xf32, #tpu.memory_space<vmem>>, vector<1x8x32xf32>
    %30 = vector.shape_cast %29 : vector<1x8x32xf32> to vector<8x32xf32>
    %31 = vector.shape_cast %28 : vector<8x32xf32> to vector<1x8x32xf32>
    tpu.vector_store %arg10[%c0_16, %c0_17, %c0_18], %31 {strides = array<i32>} : memref<1x8x32xf32, #tpu.memory_space<vmem>>, vector<1x8x32xf32>,
    %c0_19 = arith.constant 0 : index
    %c0_20 = arith.constant 0 : index
    %c0_21 = arith.constant 0 : index
    %32 = vector.load %arg11[%c0_19, %c0_20, %c0_21] : memref<1x8x8xf32, #tpu.memory_space<vmem>>, vector<1x8x8xf32>
    %33 = vector.shape_cast %32 : vector<1x8x8xf32> to vector<8x8xf32>
    %34 = vector.shape_cast %25 : vector<8x8xf32> to vector<1x8x8xf32>
    tpu.vector_store %arg11[%c0_19, %c0_20, %c0_21], %34 {strides = array<i32>} : memref<1x8x8xf32, #tpu.memory_space<vmem>>, vector<1x8x8xf32>,
    return
  }
  func.func @transform_0(%arg0: i32, %arg1: i32) -> (i32, i32, i32) {
    %c0_i32 = arith.constant 0 : i32
    %c0_i32_0 = arith.constant 0 : i32
    %c0_i32_1 = arith.constant 0 : i32
    return %arg0, %c0_i32, %c0_i32_0 : i32, i32, i32
  }
  func.func @transform_1(%arg0: i32, %arg1: i32) -> (i32, i32, i32) {
    %c0_i32 = arith.constant 0 : i32
    %c0_i32_0 = arith.constant 0 : i32
    return %arg0, %arg1, %c0_i32 : i32, i32, i32
  }
  func.func @transform_2(%arg0: i32, %arg1: i32) -> (i32, i32) {
    %c0_i32 = arith.constant 0 : i32
    %c0_i32_0 = arith.constant 0 : i32
    %c0_i32_1 = arith.constant 0 : i32
    return %c0_i32, %c0_i32_0 : i32, i32
  }
  func.func @transform_3(%arg0: i32, %arg1: i32) -> (i32, i32) {
    %c0_i32 = arith.constant 0 : i32
    %c0_i32_0 = arith.constant 0 : i32
    %c0_i32_1 = arith.constant 0 : i32
    return %c0_i32, %c0_i32_0 : i32, i32
  }
  func.func @transform_4(%arg0: i32, %arg1: i32) -> (i32, i32) {
    %c0_i32 = arith.constant 0 : i32
    %c0_i32_0 = arith.constant 0 : i32
    %c0_i32_1 = arith.constant 0 : i32
    return %c0_i32, %c0_i32_0 : i32, i32
  }
  func.func @transform_5(%arg0: i32, %arg1: i32) -> (i32, i32) {
    %c0_i32 = arith.constant 0 : i32
    %c0_i32_0 = arith.constant 0 : i32
    %c0_i32_1 = arith.constant 0 : i32
    return %c0_i32, %c0_i32_0 : i32, i32
  }
  func.func @transform_6(%arg0: i32, %arg1: i32) -> (i32, i32) {
    %c0_i32 = arith.constant 0 : i32
    %c0_i32_0 = arith.constant 0 : i32
    %c0_i32_1 = arith.constant 0 : i32
    return %c0_i32, %c0_i32_0 : i32, i32
  }
  func.func @transform_7(%arg0: i32, %arg1: i32) -> (i32, i32) {
    %c0_i32 = arith.constant 0 : i32
    %c0_i32_0 = arith.constant 0 : i32
    %c0_i32_1 = arith.constant 0 : i32
    return %c0_i32, %c0_i32_0 : i32, i32
  }
  func.func @transform_8(%arg0: i32, %arg1: i32) -> (i32, i32, i32) {
    %c0_i32 = arith.constant 0 : i32
    %c0_i32_0 = arith.constant 0 : i32
    return %arg0, %arg1, %c0_i32 : i32, i32, i32
  }
  func.func @transform_9(%arg0: i32, %arg1: i32) -> (i32, i32, i32) {
    %c0_i32 = arith.constant 0 : i32
    %c0_i32_0 = arith.constant 0 : i32
    return %arg0, %arg1, %c0_i32 : i32, i32, i32
  }
}

</mosaic_0001>

<llo_original>
// kernel: tpu_custom_call.1
$region0: #{tpu_custom_call.1}
  #allocation0 [shape = 'u32[]', space=smem, size = 0x4, offset = 0x4, fixed_abs, tag = 'smem constant byte address 0x4 - core index']
  #allocation1 [shape = 'u32[144,128]{1,0:T(1,128)}', space=vmem, size = 0x12000, scoped, tag = 'internal scratch']
  #allocation2 [shape = 'bf16[8,32]{1,0:T(8,128)(2,1)}', space=vmem, size = 0x800, scoped, tag = 'scratch operand']
  #allocation3 [shape = 'bf16[8,32]{1,0:T(8,128)(2,1)}', space=vmem, size = 0x800, scoped, tag = 'scratch operand']
  %s0 = inlined_call_operand.hbm [shape: f32[2,8,32], index: 0, kind: input, shape index: {}]
  %s1 = inlined_call_operand.hbm [shape: f32[2,16,32], index: 1, kind: input, shape index: {}]
  %s2 = inlined_call_operand.hbm [shape: bf16[32,32], index: 2, kind: input, shape index: {}]
  %s3 = inlined_call_operand.vmem [shape: f32[1,32], index: 3, kind: input, shape index: {}]
  %s4 = inlined_call_operand.hbm [shape: bf16[32,32], index: 4, kind: input, shape index: {}]
  %s5 = inlined_call_operand.vmem [shape: f32[1,32], index: 5, kind: input, shape index: {}]
  %s6 = inlined_call_operand.vmem [shape: bf16[32,32], index: 6, kind: input, shape index: {}]
  %s7 = inlined_call_operand.vmem [shape: f32[1,32], index: 7, kind: input, shape index: {}]
  %s8 = inlined_call_operand.hbm [shape: f32[2,16,32], index: 8, kind: output, shape index: {0}]
  %s9 = inlined_call_operand.vmem [shape: f32[2,16,8], index: 9, kind: output, shape index: {1}]
  %10 = xla_tuple %s8, %s9
  %s11 = sld [smem:[#allocation0]]
  $region93: #{tpu_custom_call.1} parent=0
    _
  %s13 = ssub.s32 1, %s11
  %s14 = scalar_select 0, %s13, %s11
  $region1: #{tpu_custom_call.1} parent=0
    #allocation4 [shape = 'u8[8192]{0}', space=vmem, size = 0x2000, scoped, tag = 'input window, operand 0']
    #allocation5 [shape = 's32[2]{0}', space=sflag, size = 0x8, scoped, tag = 'scoped memory for tpu_custom_call.1']
    #allocation6 [shape = 's32[2]{0}', space=sflag, size = 0x8, scoped, tag = 'scoped memory for tpu_custom_call.1']
    #allocation7 [shape = 'u8[8192]{0}', space=vmem, size = 0x2000, scoped, tag = 'input window, operand 1']
    #allocation8 [shape = 's32[2]{0}', space=sflag, size = 0x8, scoped, tag = 'scoped memory for tpu_custom_call.1']
    #allocation9 [shape = 'u8[8192]{0}', space=vmem, size = 0x2000, scoped, tag = 'input window, operand 2, single buffered']
    #allocation10 [shape = 'u8[8192]{0}', space=vmem, size = 0x2000, scoped, tag = 'input window, operand 4, single buffered']
    #allocation11 [shape = 's32[1]{0}', space=sflag, size = 0x4, scoped, tag = 'scoped memory for tpu_custom_call.1']
    #allocation12 [shape = 'u8[8192]{0}', space=vmem, size = 0x2000, scoped, tag = 'output window, operand 0']
    %15 = vsyncpa [#allocation5], 0
    %s16 = scalar_lea.sflag [#allocation5], 1
    %17 = vsyncpa %s16, 0
    %18 = vsyncpa [#allocation8], 0
    %s19 = scalar_lea.sflag [#allocation8], 1
    %20 = vsyncpa %s19, 0
    %21 = vsyncpa [#allocation11], 0
    %22 = vsyncpa [#allocation6], 0
    %s23 = scalar_lea.sflag [#allocation6], 1
    %24 = vsyncpa %s23, 0
    loop: start=0, step=1, limit=6
    $region2: #{tpu_custom_call.1} parent=1 // loop_pre_header
      _
    $region3: #{tpu_custom_call.1} parent=1 // loop_header
      %s26 = sphi 0, %s30
      %p27 = scmp.ge.s32.totalorder %s26, 6
      %s33 = sphi 0, %s45
      %s34 = sphi 0, %s41
      %s35 = sphi 0, %s33
      %s36 = sphi 0, %s34
      %s37 = sphi 0, %s35
      %s38 = sphi 0, %s36
      %s48 = sphi 0, %s50
      %s51 = sphi 0, %s48
      %s52 = sphi 0, %s51
      %s68 = sphi 0, %s52
      %s76 = sphi 0, %s78
      %s79 = sphi 0, %s76
      %s80 = sphi 0, %s79
      %s96 = sphi 0, %s80
      %s100 = sphi 0, %s100
      %s102 = sphi 0, %s100
      %s103 = sphi 0, %s102
      %s117 = sphi 0, %s103
      %s121 = sphi 0, %s121
      %s123 = sphi 0, %s121
      %s124 = sphi 0, %s123
      %s138 = sphi 0, %s124
      %s142 = sphi 0, %s142
      %s144 = sphi 0, %s142
      %s145 = sphi 0, %s144
      %s159 = sphi 0, %s145
      %s163 = sphi 0, %s163
      %s165 = sphi 0, %s163
      %s166 = sphi 0, %s165
      %s180 = sphi 0, %s166
      %s184 = sphi 0, %s184
      %s186 = sphi 0, %s184
      %s187 = sphi 0, %s186
      %s201 = sphi 0, %s187
      %s205 = sphi 0, %s205
      %s207 = sphi 0, %s205
      %s208 = sphi 0, %s207
      %s222 = sphi 0, %s208
      %s230 = sphi 0, %s232
      %s233 = sphi 0, %s230
      %s234 = sphi 0, %s233
      %s250 = sphi 0, %s234
      %s258 = sphi 0, %s260
      %s261 = sphi 0, %s258
      %s262 = sphi 0, %s261
      %s278 = sphi 0, %s262
    $region4: #{tpu_custom_call.1} parent=1 // loop_header_branch
      %29 = sbr.rel (%p27) target = $region8
    $region5: #{tpu_custom_call.1} parent=1 // loop_body
      %s31 = ssub.s32 %s26, 1
      %s32 = ssub.s32 %s26, 2
      %s39 = sadd.s32 1, %s34
      %p40 = scmp.ge.s32.totalorder %s39, 2
      %s41 = scalar_select %p40, 0, %s39
      %s42 = sadd.s32 1, %s33
      %s43 = scalar_select %p40, %s42, %s33
      %p44 = scmp.ge.s32.totalorder %s43, 2
      %s45 = scalar_select %p44, 0, %s43
      %s46 = ssub.s32 %s33, %s45
      %p47 = scmp.eq.s32.totalorder %s46, 0
      %s49 = sadd.s32 %s48, 1
      %s50 = scalar_select %p47, %s48, %s49
      %p53 = pneg %p47
      %p54 = scmp.eq.s32.totalorder %s26, 3
      %p55 = por %p53, %p54
      %p56 = scmp.ne.s32.totalorder %s48, %s51
      %p57 = scmp.eq.s32.totalorder %s26, 0
      %p58 = por %p56, %p57
      %p59 = scmp.ne.s32.totalorder %s48, %s51
      %p60 = scmp.eq.s32.totalorder %s31, 3
      %p61 = por %p59, %p60
      %p62 = scmp.ne.s32.totalorder %s51, %s52
      %p63 = scmp.eq.s32.totalorder %s31, 0
      %p64 = por %p62, %p63
      %p65 = scmp.ne.s32.totalorder %s51, %s52
      %p66 = scmp.eq.s32.totalorder %s32, 3
      %p67 = por %p65, %p66
      %p69 = scmp.ne.s32.totalorder %s52, %s68
      %p70 = scmp.eq.s32.totalorder %s32, 0
      %p71 = por %p69, %p70
      %s72 = ssub.s32 %s33, %s45
      %s73 = ssub.s32 %s34, %s41
      %s74 = sor.u32 %s72, %s73
      %p75 = scmp.eq.s32.totalorder %s74, 0
      %s77 = sadd.s32 %s76, 1
      %s78 = scalar_select %p75, %s76, %s77
      %p81 = pneg %p75
      %p82 = scmp.eq.s32.totalorder %s26, 3
      %p83 = por %p81, %p82
      %p84 = scmp.ne.s32.totalorder %s76, %s79
      %p85 = scmp.eq.s32.totalorder %s26, 0
      %p86 = por %p84, %p85
      %p87 = scmp.ne.s32.totalorder %s76, %s79
      %p88 = scmp.eq.s32.totalorder %s31, 3
      %p89 = por %p87, %p88
      %p90 = scmp.ne.s32.totalorder %s79, %s80
      %p91 = scmp.eq.s32.totalorder %s31, 0
      %p92 = por %p90, %p91
      %p93 = scmp.ne.s32.totalorder %s79, %s80
      %p94 = scmp.eq.s32.totalorder %s32, 3
      %p95 = por %p93, %p94
      %p97 = scmp.ne.s32.totalorder %s80, %s96
      %p98 = scmp.eq.s32.totalorder %s32, 0
      %p99 = por %p97, %p98
      %s101 = sadd.s32 %s100, 1
      %p104 = scmp.eq.s32.totalorder %s26, 3
      %p105 = scmp.ne.s32.totalorder %s100, %s102
      %p106 = scmp.eq.s32.totalorder %s26, 0
      %p107 = por %p105, %p106
      %p108 = scmp.ne.s32.totalorder %s100, %s102
      %p109 = scmp.eq.s32.totalorder %s31, 3
      %p110 = por %p108, %p109
      %p111 = scmp.ne.s32.totalorder %s102, %s103
      %p112 = scmp.eq.s32.totalorder %s31, 0
      %p113 = por %p111, %p112
      %p114 = scmp.ne.s32.totalorder %s102, %s103
      %p115 = scmp.eq.s32.totalorder %s32, 3
      %p116 = por %p114, %p115
      %p118 = scmp.ne.s32.totalorder %s103, %s117
      %p119 = scmp.eq.s32.totalorder %s32, 0
      %p120 = por %p118, %p119
      %s122 = sadd.s32 %s121, 1
      %p125 = scmp.eq.s32.totalorder %s26, 3
      %p126 = scmp.ne.s32.totalorder %s121, %s123
      %p127 = scmp.eq.s32.totalorder %s26, 0
      %p128 = por %p126, %p127
      %p129 = scmp.ne.s32.totalorder %s121, %s123
      %p130 = scmp.eq.s32.totalorder %s31, 3
      %p131 = por %p129, %p130
      %p132 = scmp.ne.s32.totalorder %s123, %s124
      %p133 = scmp.eq.s32.totalorder %s31, 0
      %p134 = por %p132, %p133
      %p135 = scmp.ne.s32.totalorder %s123, %s124
      %p136 = scmp.eq.s32.totalorder %s32, 3
      %p137 = por %p135, %p136
      %p139 = scmp.ne.s32.totalorder %s124, %s138
      %p140 = scmp.eq.s32.totalorder %s32, 0
      %p141 = por %p139, %p140
      %s143 = sadd.s32 %s142, 1
      %p146 = scmp.eq.s32.totalorder %s26, 3
      %p147 = scmp.ne.s32.totalorder %s142, %s144
      %p148 = scmp.eq.s32.totalorder %s26, 0
      %p149 = por %p147, %p148
      %p150 = scmp.ne.s32.totalorder %s142, %s144
      %p151 = scmp.eq.s32.totalorder %s31, 3
      %p152 = por %p150, %p151
      %p153 = scmp.ne.s32.totalorder %s144, %s145
      %p154 = scmp.eq.s32.totalorder %s31, 0
      %p155 = por %p153, %p154
      %p156 = scmp.ne.s32.totalorder %s144, %s145
      %p157 = scmp.eq.s32.totalorder %s32, 3
      %p158 = por %p156, %p157
      %p160 = scmp.ne.s32.totalorder %s145, %s159
      %p161 = scmp.eq.s32.totalorder %s32, 0
      %p162 = por %p160, %p161
      %s164 = sadd.s32 %s163, 1
      %p167 = scmp.eq.s32.totalorder %s26, 3
      %p168 = scmp.ne.s32.totalorder %s163, %s165
      %p169 = scmp.eq.s32.totalorder %s26, 0
      %p170 = por %p168, %p169
      %p171 = scmp.ne.s32.totalorder %s163, %s165
      %p172 = scmp.eq.s32.totalorder %s31, 3
      %p173 = por %p171, %p172
      %p174 = scmp.ne.s32.totalorder %s165, %s166
      %p175 = scmp.eq.s32.totalorder %s31, 0
      %p176 = por %p174, %p175
      %p177 = scmp.ne.s32.totalorder %s165, %s166
      %p178 = scmp.eq.s32.totalorder %s32, 3
      %p179 = por %p177, %p178
      %p181 = scmp.ne.s32.totalorder %s166, %s180
      %p182 = scmp.eq.s32.totalorder %s32, 0
      %p183 = por %p181, %p182
      %s185 = sadd.s32 %s184, 1
      %p188 = scmp.eq.s32.totalorder %s26, 3
      %p189 = scmp.ne.s32.totalorder %s184, %s186
      %p190 = scmp.eq.s32.totalorder %s26, 0
      %p191 = por %p189, %p190
      %p192 = scmp.ne.s32.totalorder %s184, %s186
      %p193 = scmp.eq.s32.totalorder %s31, 3
      %p194 = por %p192, %p193
      %p195 = scmp.ne.s32.totalorder %s186, %s187
      %p196 = scmp.eq.s32.totalorder %s31, 0
      %p197 = por %p195, %p196
      %p198 = scmp.ne.s32.totalorder %s186, %s187
      %p199 = scmp.eq.s32.totalorder %s32, 3
      %p200 = por %p198, %p199
      %p202 = scmp.ne.s32.totalorder %s187, %s201
      %p203 = scmp.eq.s32.totalorder %s32, 0
      %p204 = por %p202, %p203
      %s206 = sadd.s32 %s205, 1
      %p209 = scmp.eq.s32.totalorder %s26, 3
      %p210 = scmp.ne.s32.totalorder %s205, %s207
      %p211 = scmp.eq.s32.totalorder %s26, 0
      %p212 = por %p210, %p211
      %p213 = scmp.ne.s32.totalorder %s205, %s207
      %p214 = scmp.eq.s32.totalorder %s31, 3
      %p215 = por %p213, %p214
      %p216 = scmp.ne.s32.totalorder %s207, %s208
      %p217 = scmp.eq.s32.totalorder %s31, 0
      %p218 = por %p216, %p217
      %p219 = scmp.ne.s32.totalorder %s207, %s208
      %p220 = scmp.eq.s32.totalorder %s32, 3
      %p221 = por %p219, %p220
      %p223 = scmp.ne.s32.totalorder %s208, %s222
      %p224 = scmp.eq.s32.totalorder %s32, 0
      %p225 = por %p223, %p224
      %s226 = ssub.s32 %s33, %s45
      %s227 = ssub.s32 %s34, %s41
      %s228 = sor.u32 %s226, %s227
      %p229 = scmp.eq.s32.totalorder %s228, 0
      %s231 = sadd.s32 %s230, 1
      %s232 = scalar_select %p229, %s230, %s231
      %p235 = pneg %p229
      %p236 = scmp.eq.s32.totalorder %s26, 3
      %p237 = por %p235, %p236
      %p238 = scmp.ne.s32.totalorder %s230, %s233
      %p239 = scmp.eq.s32.totalorder %s26, 0
      %p240 = por %p238, %p239
      %p241 = scmp.ne.s32.totalorder %s230, %s233
      %p242 = scmp.eq.s32.totalorder %s31, 3
      %p243 = por %p241, %p242
      %p244 = scmp.ne.s32.totalorder %s233, %s234
      %p245 = scmp.eq.s32.totalorder %s31, 0
      %p246 = por %p244, %p245
      %p247 = scmp.ne.s32.totalorder %s233, %s234
      %p248 = scmp.eq.s32.totalorder %s32, 3
      %p249 = por %p247, %p248
      %p251 = scmp.ne.s32.totalorder %s234, %s250
      %p252 = scmp.eq.s32.totalorder %s32, 0
      %p253 = por %p251, %p252
      %s254 = ssub.s32 %s33, %s45
      %s255 = ssub.s32 %s34, %s41
      %s256 = sor.u32 %s254, %s255
      %p257 = scmp.eq.s32.totalorder %s256, 0
      %s259 = sadd.s32 %s258, 1
      %s260 = scalar_select %p257, %s258, %s259
      %p263 = pneg %p257
      %p264 = scmp.eq.s32.totalorder %s26, 3
      %p265 = por %p263, %p264
      %p266 = scmp.ne.s32.totalorder %s258, %s261
      %p267 = scmp.eq.s32.totalorder %s26, 0
      %p268 = por %p266, %p267
      %p269 = scmp.ne.s32.totalorder %s258, %s261
      %p270 = scmp.eq.s32.totalorder %s31, 3
      %p271 = por %p269, %p270
      %p272 = scmp.ne.s32.totalorder %s261, %s262
      %p273 = scmp.eq.s32.totalorder %s31, 0
      %p274 = por %p272, %p273
      %p275 = scmp.ne.s32.totalorder %s261, %s262
      %p276 = scmp.eq.s32.totalorder %s32, 3
      %p277 = por %p275, %p276
      %p279 = scmp.ne.s32.totalorder %s262, %s278
      %p280 = scmp.eq.s32.totalorder %s32, 0
      %p281 = por %p279, %p280
      %p282 = scmp.le.s32.totalorder 1, %s26
      %p283 = scmp.lt.s32.totalorder %s26, 5
      %p284 = pnand %p282, %p283
      %p285 = pneg %p284
      // Predicated region
      $region9: #{tpu_custom_call.1} parent=5 // pred_check
        _
      $region10: #{tpu_custom_call.1} parent=5 // pred_check_branch
        %287 = sbr.rel (%p284) target = $region12
      $region11: #{tpu_custom_call.1} parent=5 // pred_region
        %s288 = ssub.s32 %s26, 1
        // Predicated region
        $region13: #{tpu_custom_call.1} parent=11 // pred_check
          %p289 = pneg %p113
        $region14: #{tpu_custom_call.1} parent=11 // pred_check_branch
          %291 = sbr.rel (%p289) target = $region16
        $region15: #{tpu_custom_call.1} parent=11 // pred_region
          %s293 = ssub.s32 256, 256
          %294 = vsyncadd [#allocation8], %s293
          %s295 = sshll.u32 [#allocation9], 4
          %s296 = int_to_ptr.vmem [resolvable:$true] %s295
          %301 = dma.hbm_to_vmem [thread:$0]  %s2, 256, %s296, [#allocation8], 64, 64, 4
        $region16: #{tpu_custom_call.1} parent=11 // pred_fallthru
          _
        // Predicated region
        $region17: #{tpu_custom_call.1} parent=11 // pred_check
          %p302 = pneg %p134
        $region18: #{tpu_custom_call.1} parent=11 // pred_check_branch
          %304 = sbr.rel (%p302) target = $region20
        $region19: #{tpu_custom_call.1} parent=11 // pred_region
          _
        $region20: #{tpu_custom_call.1} parent=11 // pred_fallthru
          _
        // Predicated region
        $region21: #{tpu_custom_call.1} parent=11 // pred_check
          %p305 = pneg %p155
        $region22: #{tpu_custom_call.1} parent=11 // pred_check_branch
          %307 = sbr.rel (%p305) target = $region24
        $region23: #{tpu_custom_call.1} parent=11 // pred_region
          %s309 = ssub.s32 256, 256
          %310 = vsyncadd [#allocation11], %s309
          %s311 = sshll.u32 [#allocation10], 4
          %s312 = int_to_ptr.vmem [resolvable:$true] %s311
          %317 = dma.hbm_to_vmem [thread:$0]  %s4, 256, %s312, [#allocation11], 64, 64, 4
        $region24: #{tpu_custom_call.1} parent=11 // pred_fallthru
          _
        // Predicated region
        $region25: #{tpu_custom_call.1} parent=11 // pred_check
          %p318 = pneg %p176
        $region26: #{tpu_custom_call.1} parent=11 // pred_check_branch
          %320 = sbr.rel (%p318) target = $region28
        $region27: #{tpu_custom_call.1} parent=11 // pred_region
          _
        $region28: #{tpu_custom_call.1} parent=11 // pred_fallthru
          _
        // Predicated region
        $region29: #{tpu_custom_call.1} parent=11 // pred_check
          %p321 = pneg %p197
        $region30: #{tpu_custom_call.1} parent=11 // pred_check_branch
          %323 = sbr.rel (%p321) target = $region32
        $region31: #{tpu_custom_call.1} parent=11 // pred_region
          _
        $region32: #{tpu_custom_call.1} parent=11 // pred_fallthru
          _
        // Predicated region
        $region33: #{tpu_custom_call.1} parent=11 // pred_check
          %p324 = pneg %p218
        $region34: #{tpu_custom_call.1} parent=11 // pred_check_branch
          %326 = sbr.rel (%p324) target = $region36
        $region35: #{tpu_custom_call.1} parent=11 // pred_region
          _
        $region36: #{tpu_custom_call.1} parent=11 // pred_fallthru
          _
      $region12: #{tpu_custom_call.1} parent=5 // pred_fallthru
        _
      %p327 = scmp.lt.s32.totalorder %s26, 4
      // Predicated region
      $region37: #{tpu_custom_call.1} parent=5 // pred_check
        %p328 = pneg %p327
      $region38: #{tpu_custom_call.1} parent=5 // pred_check_branch
        %330 = sbr.rel (%p328) target = $region40
      $region39: #{tpu_custom_call.1} parent=5 // pred_region
        // Predicated region
        $region41: #{tpu_custom_call.1} parent=39 // pred_check
          %p331 = pneg %p58
        $region42: #{tpu_custom_call.1} parent=39 // pred_check_branch
          %333 = sbr.rel (%p331) target = $region44
        $region43: #{tpu_custom_call.1} parent=39 // pred_region
          %s334 = sand.u32 %s48, 1
          %s335 = scalar_lea.sflag [#allocation5], %s334
          %s336 = sand.u32 %s48, 1
          %s337 = smul.addr %s336, 8
          %s338 = scalar_lea.vmem [#allocation4], %s337
          %s340 = ssub.s32 128, 128
          %341 = vsyncadd %s335, %s340
          %s342 = smul.addr %s33, 128
          %s343 = scalar_lea.hbm %s0, %s342
          %s345 = sshll.u32 %s338, 4
          %s346 = int_to_ptr.vmem [resolvable:$true] %s345
          %348 = dma.hbm_to_vmem [thread:$0]  %s343, 128, %s346, %s335
        $region44: #{tpu_custom_call.1} parent=39 // pred_fallthru
          _
        // Predicated region
        $region45: #{tpu_custom_call.1} parent=39 // pred_check
          %p349 = pneg %p86
        $region46: #{tpu_custom_call.1} parent=39 // pred_check_branch
          %351 = sbr.rel (%p349) target = $region48
        $region47: #{tpu_custom_call.1} parent=39 // pred_region
          %s352 = sand.u32 %s26, 1
          %s353 = scalar_lea.sflag [#allocation8], %s352
          %s354 = sand.u32 %s76, 1
          %s355 = smul.addr %s354, 8
          %s356 = scalar_lea.vmem [#allocation7], %s355
          %s358 = ssub.s32 128, 128
          %359 = vsyncadd %s353, %s358
          %s360 = smul.addr %s33, 2
          %s361 = sadd.s32 %s34, %s360
          %s362 = smul.addr %s361, 128
          %s363 = scalar_lea.hbm %s1, %s362
          %s365 = sshll.u32 %s356, 4
          %s366 = int_to_ptr.vmem [resolvable:$true] %s365
          %368 = dma.hbm_to_vmem [thread:$0]  %s363, 128, %s366, %s353
        $region48: #{tpu_custom_call.1} parent=39 // pred_fallthru
          _
      $region40: #{tpu_custom_call.1} parent=5 // pred_fallthru
        _
      %p369 = scmp.le.s32.totalorder 1, %s26
      %p370 = scmp.lt.s32.totalorder %s26, 5
      %p371 = pnand %p369, %p370
      %p372 = pneg %p371
      // Predicated region
      $region49: #{tpu_custom_call.1} parent=5 // pred_check
        _
      $region50: #{tpu_custom_call.1} parent=5 // pred_check_branch
        %374 = sbr.rel (%p371) target = $region52
      $region51: #{tpu_custom_call.1} parent=5 // pred_region
        %s375 = ssub.s32 %s26, 1
        %s376 = sand.u32 %s51, 1
        %s377 = scalar_lea.sflag [#allocation5], %s376
        %s378 = sand.u32 %s51, 1
        %s379 = smul.addr %s378, 8
        %s380 = scalar_lea.vmem [#allocation4], %s379
        // Predicated region
        $region53: #{tpu_custom_call.1} parent=51 // pred_check
          %p381 = pneg %p64
        $region54: #{tpu_custom_call.1} parent=51 // pred_check_branch
          %383 = sbr.rel (%p381) target = $region56
        $region55: #{tpu_custom_call.1} parent=51 // pred_region
          %384 = dma.done %s377, 128
        $region56: #{tpu_custom_call.1} parent=51 // pred_fallthru
          _
        %s385 = sand.u32 %s31, 1
        %s386 = scalar_lea.sflag [#allocation8], %s385
        %s387 = sand.u32 %s79, 1
        %s388 = smul.addr %s387, 8
        %s389 = scalar_lea.vmem [#allocation7], %s388
        // Predicated region
        $region57: #{tpu_custom_call.1} parent=51 // pred_check
          %p390 = pneg %p92
        $region58: #{tpu_custom_call.1} parent=51 // pred_check_branch
          %392 = sbr.rel (%p390) target = $region60
        $region59: #{tpu_custom_call.1} parent=51 // pred_region
          %393 = dma.done %s386, 128
        $region60: #{tpu_custom_call.1} parent=51 // pred_fallthru
          _
        // Predicated region
        $region61: #{tpu_custom_call.1} parent=51 // pred_check
          %p394 = pneg %p113
        $region62: #{tpu_custom_call.1} parent=51 // pred_check_branch
          %396 = sbr.rel (%p394) target = $region64
        $region63: #{tpu_custom_call.1} parent=51 // pred_region
          %397 = dma.done [#allocation8], 256
        $region64: #{tpu_custom_call.1} parent=51 // pred_fallthru
          _
        // Predicated region
        $region65: #{tpu_custom_call.1} parent=51 // pred_check
          %p398 = pneg %p155
        $region66: #{tpu_custom_call.1} parent=51 // pred_check_branch
          %400 = sbr.rel (%p398) target = $region68
        $region67: #{tpu_custom_call.1} parent=51 // pred_region
          %401 = dma.done [#allocation11], 256
        $region68: #{tpu_custom_call.1} parent=51 // pred_fallthru
          _
        %s402 = sand.u32 %s51, 1
        %s403 = scalar_lea.sflag [#allocation5], %s402
        %s404 = sand.u32 %s51, 1
        %s405 = smul.addr %s404, 8
        %s406 = scalar_lea.vmem [#allocation4], %s405
        %p407 = pneg %p64
        %p408 = pneg %p61
        %s409 = sand.u32 %s31, 1
        %s410 = scalar_lea.sflag [#allocation8], %s409
        %s411 = sand.u32 %s79, 1
        %s412 = smul.addr %s411, 8
        %s413 = scalar_lea.vmem [#allocation7], %s412
        %p414 = pneg %p92
        %p415 = pneg %p89
        %p416 = pneg %p113
        %p417 = pneg %p110
        %p418 = pneg %p134
        %p419 = pneg %p131
        %p420 = pneg %p155
        %p421 = pneg %p152
        %p422 = pneg %p176
        %p423 = pneg %p173
        %p424 = pneg %p197
        %p425 = pneg %p194
        %p426 = pneg %p218
        %p427 = pneg %p215
        %p428 = pneg %p246
        %p429 = pneg %p243
        %s430 = sand.u32 %s233, 1
        %s431 = scalar_lea.sflag [#allocation6], %s430
        %s432 = sand.u32 %s233, 1
        %s433 = smul.addr %s432, 8
        %s434 = scalar_lea.vmem [#allocation12], %s433
        %p435 = pneg %p274
        %p436 = pneg %p271
        %p437 = scmp.lt.s32.totalorder %s35, 1
        %s438 = scalar_select %p437, %s35, 1
        %p439 = scmp.lt.s32.totalorder %s36, 1
        %s440 = scalar_select %p439, %s36, 1
        %s441 = smul.addr %s438, 2
        %s442 = sadd.s32 %s440, %s441
        %s443 = smul.addr %s442, 8
        %s444 = scalar_lea.vmem %s9, %s443
        %p445 = scmp.lt.s32.totalorder %s35, 1
        %s446 = scalar_select %p445, %s35, 1
        %p447 = scmp.lt.s32.totalorder %s36, 1
        %s448 = scalar_select %p447, %s36, 1
        %s449 = smul.addr %s446, 2
        %s450 = sadd.s32 %s448, %s449
        %s451 = smul.addr %s450, 8
        %s452 = scalar_lea.vmem %s9, %s451
        %p454 = scmp.eq.s32.totalorder %s36, 0
        // Predicated region
        $region69: #{tpu_custom_call.1} parent=51 // pred_check
          %p455 = pneg %p454
        $region70: #{tpu_custom_call.1} parent=51 // pred_check_branch
          %457 = sbr.rel (%p455) target = $region72
        $region71: #{tpu_custom_call.1} parent=51 // pred_region
          %v458 = vld [vmem:[%s380] sm:$0xff]
          %v459 = vpack.c.bf16 %v458, %v458
          %v460 = vld [vmem:[#allocation10] sm:$0xf]
          %v461 = vld [vmem:[#allocation10 + $0x4] sm:$0xf]
          %v462 = vld [vmem:[#allocation10 + $0x8] sm:$0xf]
          %v463 = vld [vmem:[#allocation10 + $0xc] sm:$0xf]
          %v464 = vld [vmem:[%s5] sm:$0x1]
          %v466 = vlaneseq
          %v467 = vshrl.u32 %v466, 7
          %v468 = vsub.s32 0, %v467
          %v469 = vrot.slane %v464, %v468
          %v475 = vunpack.c.l.b16 %v460
          %v476 = vunpack.c.l.b16 %v461
          %v477 = vunpack.c.l.b16 %v462
          %v478 = vunpack.c.l.b16 %v463
          %v479 = vpack.c.b16 %v476, %v475
          %v480 = vpack.c.b16 %v478, %v477
          %vm481 = vcmask 261120
          %v483 = vsel %vm481, %v459, 0
          %v486 = vsel %vm481, %v479, 0
          %v489 = vsel %vm481, %v480, 0
          %491 = vmatprep.subr.bf16.mxu0 0
          %492 = vmatpush1.bf16.xpose.msra.mxu0 %v486
          %493 = vmatprep.subr.bf16.mxu0 0
          %494 = vmatpush1.bf16.xpose.msra.mxu0 %v489
          %495 = vmatprep.subr.bf16.mxu0 0
          %496 = vmatpush1.bf16.xpose.msra.mxu0 0
          %497 = vmatprep.subr.bf16.mxu0 0
          %498 = vmatpush1.bf16.xpose.msra.mxu0 0
          %499 = vmatprep.subr.bf16.mxu0 0
          %500 = vmatpush1.bf16.xpose.msra.mxu0 0
          %501 = vmatprep.subr.bf16.mxu0 0
          %502 = vmatpush1.bf16.xpose.msra.mxu0 0
          %503 = vmatprep.subr.bf16.mxu0 0
          %504 = vmatpush1.bf16.xpose.msra.mxu0 0
          %505 = vmatprep.subr.bf16.mxu0 0
          %506 = vmatpush1.bf16.xpose.msra.mxu0 0
          %507 = vmatprep.subr.bf16.mxu0 0
          %508 = vmatpush1.bf16.xpose.msra.mxu0 0
          %509 = vmatprep.subr.bf16.mxu0 0
          %510 = vmatpush1.bf16.xpose.msra.mxu0 0
          %511 = vmatprep.subr.bf16.mxu0 0
          %512 = vmatpush1.bf16.xpose.msra.mxu0 0
          %513 = vmatprep.subr.bf16.mxu0 0
          %514 = vmatpush1.bf16.xpose.msra.mxu0 0
          %515 = vmatprep.subr.bf16.mxu0 0
          %516 = vmatpush1.bf16.xpose.msra.mxu0 0
          %517 = vmatprep.subr.bf16.mxu0 0
          %518 = vmatpush1.bf16.xpose.msra.mxu0 0
          %519 = vmatprep.subr.bf16.mxu0 0
          %520 = vmatpush1.bf16.xpose.msra.mxu0 0
          %521 = vmatprep.subr.bf16.mxu0 0
          %522 = vmatpush1.bf16.xpose.msra.mxu0 0
          %523 = vmatprep.mubr.bf16.mxu0 0
          %524 = vmatmul.mubr.bf16.gmra.mrb[0].mxu0 %v483
          %v525 = vpop.f32.mrb[0].mxu0
          %v526 = vadd.f32 %v469, %v525
          %v527 = vpop.f32.mrb[0].mxu0
          %v528 = vpop.f32.mrb[0].mxu0
          %v529 = vpop.f32.mrb[0].mxu0
          %530 = vdwg.mxu0
          %v531 = vld [vmem:[%s6] sm:$0xf]
          %v532 = vld [vmem:[%s6 + $0x4] sm:$0xf]
          %v533 = vld [vmem:[%s6 + $0x8] sm:$0xf]
          %v534 = vld [vmem:[%s6 + $0xc] sm:$0xf]
          %v535 = vld [vmem:[%s7] sm:$0x1]
          %v537 = vlaneseq
          %v538 = vshrl.u32 %v537, 7
          %v539 = vsub.s32 0, %v538
          %v540 = vrot.slane %v535, %v539
          %v546 = vunpack.c.l.b16 %v531
          %v547 = vunpack.c.l.b16 %v532
          %v548 = vunpack.c.l.b16 %v533
          %v549 = vunpack.c.l.b16 %v534
          %v550 = vpack.c.b16 %v547, %v546
          %v551 = vpack.c.b16 %v549, %v548
          %v553 = vsel %vm481, %v550, 0
          %v556 = vsel %vm481, %v551, 0
          %558 = vmatprep.subr.bf16.mxu0 0
          %559 = vmatpush1.bf16.xpose.msra.mxu0 %v553
          %560 = vmatprep.subr.bf16.mxu0 0
          %561 = vmatpush1.bf16.xpose.msra.mxu0 %v556
          %562 = vmatprep.subr.bf16.mxu0 0
          %563 = vmatpush1.bf16.xpose.msra.mxu0 0
          %564 = vmatprep.subr.bf16.mxu0 0
          %565 = vmatpush1.bf16.xpose.msra.mxu0 0
          %566 = vmatprep.subr.bf16.mxu0 0
          %567 = vmatpush1.bf16.xpose.msra.mxu0 0
          %568 = vmatprep.subr.bf16.mxu0 0
          %569 = vmatpush1.bf16.xpose.msra.mxu0 0
          %570 = vmatprep.subr.bf16.mxu0 0
          %571 = vmatpush1.bf16.xpose.msra.mxu0 0
          %572 = vmatprep.subr.bf16.mxu0 0
          %573 = vmatpush1.bf16.xpose.msra.mxu0 0
          %574 = vmatprep.subr.bf16.mxu0 0
          %575 = vmatpush1.bf16.xpose.msra.mxu0 0
          %576 = vmatprep.subr.bf16.mxu0 0
          %577 = vmatpush1.bf16.xpose.msra.mxu0 0
          %578 = vmatprep.subr.bf16.mxu0 0
          %579 = vmatpush1.bf16.xpose.msra.mxu0 0
          %580 = vmatprep.subr.bf16.mxu0 0
          %581 = vmatpush1.bf16.xpose.msra.mxu0 0
          %582 = vmatprep.subr.bf16.mxu0 0
          %583 = vmatpush1.bf16.xpose.msra.mxu0 0
          %584 = vmatprep.subr.bf16.mxu0 0
          %585 = vmatpush1.bf16.xpose.msra.mxu0 0
          %586 = vmatprep.subr.bf16.mxu0 0
          %587 = vmatpush1.bf16.xpose.msra.mxu0 0
          %588 = vmatprep.subr.bf16.mxu0 0
          %589 = vmatpush1.bf16.xpose.msra.mxu0 0
          %590 = vmatprep.mubr.bf16.mxu0 0
          %591 = vmatmul.mubr.bf16.gmra.mrb[0].mxu0 %v483
          %v592 = vpop.f32.mrb[0].mxu0
          %v593 = vadd.f32 %v540, %v592
          %v594 = vpop.f32.mrb[0].mxu0
          %v595 = vpop.f32.mrb[0].mxu0
          %v596 = vpop.f32.mrb[0].mxu0
          %597 = vdwg.mxu0
          %v598 = vpack.c.bf16 %v526, %v526
          %vm599 = vcmask 257024
          %600 = vst.msk [vmem:[#allocation2] sm:$0xf] %vm599, %v598
          %v601 = vpack.c.bf16 %v593, %v593
          %602 = vst.msk [vmem:[#allocation3] sm:$0xf] %vm599, %v601
        $region72: #{tpu_custom_call.1} parent=51 // pred_fallthru
          _
        %v603 = vld [vmem:[%s389] sm:$0xff]
        %v604 = vpack.c.bf16 %v603, %v603
        %v605 = vld [vmem:[#allocation9] sm:$0xf]
        %v606 = vld [vmem:[#allocation9 + $0x4] sm:$0xf]
        %v607 = vld [vmem:[#allocation9 + $0x8] sm:$0xf]
        %v608 = vld [vmem:[#allocation9 + $0xc] sm:$0xf]
        %v609 = vld [vmem:[%s3] sm:$0x1]
        %v611 = vlaneseq
        %v612 = vshrl.u32 %v611, 7
        %v613 = vsub.s32 0, %v612
        %v614 = vrot.slane %v609, %v613
        %v620 = vunpack.c.l.b16 %v605
        %v621 = vunpack.c.l.b16 %v606
        %v622 = vunpack.c.l.b16 %v607
        %v623 = vunpack.c.l.b16 %v608
        %v624 = vpack.c.b16 %v621, %v620
        %v625 = vpack.c.b16 %v623, %v622
        %vm626 = vcmask 261120
        %v628 = vsel %vm626, %v604, 0
        %v631 = vsel %vm626, %v624, 0
        %v634 = vsel %vm626, %v625, 0
        %636 = vmatprep.subr.bf16.mxu0 0
        %637 = vmatpush1.bf16.xpose.msra.mxu0 %v631
        %638 = vmatprep.subr.bf16.mxu0 0
        %639 = vmatpush1.bf16.xpose.msra.mxu0 %v634
        %640 = vmatprep.subr.bf16.mxu0 0
        %641 = vmatpush1.bf16.xpose.msra.mxu0 0
        %642 = vmatprep.subr.bf16.mxu0 0
        %643 = vmatpush1.bf16.xpose.msra.mxu0 0
        %644 = vmatprep.subr.bf16.mxu0 0
        %645 = vmatpush1.bf16.xpose.msra.mxu0 0
        %646 = vmatprep.subr.bf16.mxu0 0
        %647 = vmatpush1.bf16.xpose.msra.mxu0 0
        %648 = vmatprep.subr.bf16.mxu0 0
        %649 = vmatpush1.bf16.xpose.msra.mxu0 0
        %650 = vmatprep.subr.bf16.mxu0 0
        %651 = vmatpush1.bf16.xpose.msra.mxu0 0
        %652 = vmatprep.subr.bf16.mxu0 0
        %653 = vmatpush1.bf16.xpose.msra.mxu0 0
        %654 = vmatprep.subr.bf16.mxu0 0
        %655 = vmatpush1.bf16.xpose.msra.mxu0 0
        %656 = vmatprep.subr.bf16.mxu0 0
        %657 = vmatpush1.bf16.xpose.msra.mxu0 0
        %658 = vmatprep.subr.bf16.mxu0 0
        %659 = vmatpush1.bf16.xpose.msra.mxu0 0
        %660 = vmatprep.subr.bf16.mxu0 0
        %661 = vmatpush1.bf16.xpose.msra.mxu0 0
        %662 = vmatprep.subr.bf16.mxu0 0
        %663 = vmatpush1.bf16.xpose.msra.mxu0 0
        %664 = vmatprep.subr.bf16.mxu0 0
        %665 = vmatpush1.bf16.xpose.msra.mxu0 0
        %666 = vmatprep.subr.bf16.mxu0 0
        %667 = vmatpush1.bf16.xpose.msra.mxu0 0
        %668 = vmatprep.mubr.bf16.mxu0 0
        %669 = vmatmul.mubr.bf16.gmra.mrb[0].mxu0 %v628
        %v670 = vpop.f32.mrb[0].mxu0
        %v671 = vadd.f32 %v614, %v670
        %v672 = vpop.f32.mrb[0].mxu0
        %v673 = vpop.f32.mrb[0].mxu0
        %v674 = vpop.f32.mrb[0].mxu0
        %675 = vdwg.mxu0
        %v676 = vmul.f32 %v671, 0.17677669
        %v677 = vpack.c.bf16 %v676, %v676
        %v678 = vld [vmem:[#allocation2] sm:$0xf]
        %v680 = vsel %vm626, %v677, 0
        %v683 = vsel %vm626, %v678, 0
        %685 = vmatprep.subr.bf16.mxu0 0
        %686 = vmatpush1.bf16.xpose.msra.mxu0 %v683
        %687 = vmatprep.subr.bf16.mxu0 0
        %688 = vmatpush1.bf16.xpose.msra.mxu0 0
        %689 = vmatprep.subr.bf16.mxu0 0
        %690 = vmatpush1.bf16.xpose.msra.mxu0 0
        %691 = vmatprep.subr.bf16.mxu0 0
        %692 = vmatpush1.bf16.xpose.msra.mxu0 0
        %693 = vmatprep.subr.bf16.mxu0 0
        %694 = vmatpush1.bf16.xpose.msra.mxu0 0
        %695 = vmatprep.subr.bf16.mxu0 0
        %696 = vmatpush1.bf16.xpose.msra.mxu0 0
        %697 = vmatprep.subr.bf16.mxu0 0
        %698 = vmatpush1.bf16.xpose.msra.mxu0 0
        %699 = vmatprep.subr.bf16.mxu0 0
        %700 = vmatpush1.bf16.xpose.msra.mxu0 0
        %701 = vmatprep.subr.bf16.mxu0 0
        %702 = vmatpush1.bf16.xpose.msra.mxu0 0
        %703 = vmatprep.subr.bf16.mxu0 0
        %704 = vmatpush1.bf16.xpose.msra.mxu0 0
        %705 = vmatprep.subr.bf16.mxu0 0
        %706 = vmatpush1.bf16.xpose.msra.mxu0 0
        %707 = vmatprep.subr.bf16.mxu0 0
        %708 = vmatpush1.bf16.xpose.msra.mxu0 0
        %709 = vmatprep.subr.bf16.mxu0 0
        %710 = vmatpush1.bf16.xpose.msra.mxu0 0
        %711 = vmatprep.subr.bf16.mxu0 0
        %712 = vmatpush1.bf16.xpose.msra.mxu0 0
        %713 = vmatprep.subr.bf16.mxu0 0
        %714 = vmatpush1.bf16.xpose.msra.mxu0 0
        %715 = vmatprep.subr.bf16.mxu0 0
        %716 = vmatpush1.bf16.xpose.msra.mxu0 0
        %717 = vmatprep.mubr.bf16.mxu0 0
        %718 = vmatmul.mubr.bf16.gmra.mrb[0].mxu0 %v680
        %v719 = vpop.f32.mrb[0].mxu0
        %v720 = vadd.f32 0.0, %v719
        %v721 = vpop.f32.mrb[0].mxu0
        %v722 = vpop.f32.mrb[0].mxu0
        %v723 = vpop.f32.mrb[0].mxu0
        %724 = vdwg.mxu0
        %vm725 = vcmask 64512
        %v726 = vsel %vm725, %v720, -inf
        %727 = vmax.xlane.f32.xlu0 %v726
        %v728 = vpop.xlane.xlu0 %727
        %v729 = vsub.f32 %v720, %v728
        %v730 = vmul.f32 %v729, 1.442695
        %v731 = vpow.pop %v730
        %v732 = vsel %vm725, %v731, 0.0
        %733 = vadd.xlane.f32.xlu0 %v732
        %v734 = vpop.xlane.xlu0 %733
        %v735 = vrcp.pop %v734
        %v736 = vmul.f32 %v731, %v735
        %v737 = vpack.c.bf16 %v736, %v736
        %v738 = vld [vmem:[#allocation3] sm:$0xf]
        %v740 = vsel %vm725, %v737, 0
        %vm742 = vcmask 1043456
        %v744 = vsel %vm742, %v738, 0
        %746 = vmatprep.subr.bf16.mxu0 0
        %747 = vmatpush1.bf16.msra.mxu0 %v744
        %748 = vmatprep.subr.bf16.mxu0 0
        %749 = vmatpush1.bf16.msra.mxu0 0
        %750 = vmatprep.subr.bf16.mxu0 0
        %751 = vmatpush1.bf16.msra.mxu0 0
        %752 = vmatprep.subr.bf16.mxu0 0
        %753 = vmatpush1.bf16.msra.mxu0 0
        %754 = vmatprep.subr.bf16.mxu0 0
        %755 = vmatpush1.bf16.msra.mxu0 0
        %756 = vmatprep.subr.bf16.mxu0 0
        %757 = vmatpush1.bf16.msra.mxu0 0
        %758 = vmatprep.subr.bf16.mxu0 0
        %759 = vmatpush1.bf16.msra.mxu0 0
        %760 = vmatprep.subr.bf16.mxu0 0
        %761 = vmatpush1.bf16.msra.mxu0 0
        %762 = vmatprep.subr.bf16.mxu0 0
        %763 = vmatpush1.bf16.msra.mxu0 0
        %764 = vmatprep.subr.bf16.mxu0 0
        %765 = vmatpush1.bf16.msra.mxu0 0
        %766 = vmatprep.subr.bf16.mxu0 0
        %767 = vmatpush1.bf16.msra.mxu0 0
        %768 = vmatprep.subr.bf16.mxu0 0
        %769 = vmatpush1.bf16.msra.mxu0 0
        %770 = vmatprep.subr.bf16.mxu0 0
        %771 = vmatpush1.bf16.msra.mxu0 0
        %772 = vmatprep.subr.bf16.mxu0 0
        %773 = vmatpush1.bf16.msra.mxu0 0
        %774 = vmatprep.subr.bf16.mxu0 0
        %775 = vmatpush1.bf16.msra.mxu0 0
        %776 = vmatprep.subr.bf16.mxu0 0
        %777 = vmatpush1.bf16.msra.mxu0 0
        %778 = vmatprep.mubr.bf16.mxu0 0
        %779 = vmatmul.mubr.bf16.gmra.mrb[0].mxu0 %v740
        %v780 = vpop.f32.mrb[0].mxu0
        %v781 = vadd.f32 0.0, %v780
        %v782 = vpop.f32.mrb[0].mxu0
        %v783 = vpop.f32.mrb[0].mxu0
        %v784 = vpop.f32.mrb[0].mxu0
        %785 = vdwg.mxu0
        %786 = vst.msk [vmem:[%s434] sm:$0xff] %vm626, %v781
        %787 = vst.msk [vmem:[%s452] sm:$0xff] %vm725, %v736
        %s788 = sand.u32 %s233, 1
        %s789 = scalar_lea.sflag [#allocation6], %s788
        %s790 = sand.u32 %s233, 1
        %s791 = smul.addr %s790, 8
        %s792 = scalar_lea.vmem [#allocation12], %s791
        %p793 = scmp.lt.s32.totalorder %s35, 1
        %s794 = scalar_select %p793, %s35, 1
        %p795 = scmp.lt.s32.totalorder %s36, 1
        %s796 = scalar_select %p795, %s36, 1
        %s797 = smul.addr %s794, 2
        %s798 = sadd.s32 %s796, %s797
        %s799 = smul.addr %s798, 8
        %s800 = scalar_lea.vmem %s9, %s799
        // Predicated region
        $region73: #{tpu_custom_call.1} parent=51 // pred_check
          %p801 = pneg %p243
        $region74: #{tpu_custom_call.1} parent=51 // pred_check_branch
          %803 = sbr.rel (%p801) target = $region76
        $region75: #{tpu_custom_call.1} parent=51 // pred_region
          %s805 = ssub.s32 128, 128
          %806 = vsyncadd %s789, %s805
          %s807 = smul.addr %s35, 2
          %s808 = sadd.s32 %s36, %s807
          %s809 = smul.addr %s808, 128
          %s810 = scalar_lea.hbm %s8, %s809
          %s812 = sshll.u32 %s792, 4
          %s813 = int_to_ptr.vmem [resolvable:$true] %s812
          %815 = dma.vmem_to_hbm [thread:$0]  %s813, 128, %s810, %s789
        $region76: #{tpu_custom_call.1} parent=51 // pred_fallthru
          _
        // Predicated region
        $region77: #{tpu_custom_call.1} parent=51 // pred_check
          %p816 = pneg %p271
        $region78: #{tpu_custom_call.1} parent=51 // pred_check_branch
          %818 = sbr.rel (%p816) target = $region80
        $region79: #{tpu_custom_call.1} parent=51 // pred_region
          _
        $region80: #{tpu_custom_call.1} parent=51 // pred_fallthru
          _
      $region52: #{tpu_custom_call.1} parent=5 // pred_fallthru
        _
      %p819 = scmp.le.s32.totalorder 2, %s26
      // Predicated region
      $region81: #{tpu_custom_call.1} parent=5 // pred_check
        %p820 = pneg %p819
      $region82: #{tpu_custom_call.1} parent=5 // pred_check_branch
        %822 = sbr.rel (%p820) target = $region84
      $region83: #{tpu_custom_call.1} parent=5 // pred_region
        %s823 = ssub.s32 %s26, 2
        // Predicated region
        $region85: #{tpu_custom_call.1} parent=83 // pred_check
          %p824 = pneg %p249
        $region86: #{tpu_custom_call.1} parent=83 // pred_check_branch
          %826 = sbr.rel (%p824) target = $region88
        $region87: #{tpu_custom_call.1} parent=83 // pred_region
          %s827 = sand.u32 %s234, 1
          %s828 = scalar_lea.sflag [#allocation6], %s827
          %s829 = sand.u32 %s234, 1
          %s830 = smul.addr %s829, 8
          %s831 = scalar_lea.vmem [#allocation12], %s830
          %832 = dma.done %s828, 128
        $region88: #{tpu_custom_call.1} parent=83 // pred_fallthru
          _
        // Predicated region
        $region89: #{tpu_custom_call.1} parent=83 // pred_check
          %p833 = pneg %p277
        $region90: #{tpu_custom_call.1} parent=83 // pred_check_branch
          %835 = sbr.rel (%p833) target = $region92
        $region91: #{tpu_custom_call.1} parent=83 // pred_region
          %p836 = scmp.lt.s32.totalorder %s37, 1
          %s837 = scalar_select %p836, %s37, 1
          %p838 = scmp.lt.s32.totalorder %s38, 1
          %s839 = scalar_select %p838, %s38, 1
          %s840 = smul.addr %s837, 2
          %s841 = sadd.s32 %s839, %s840
          %s842 = smul.addr %s841, 8
          %s843 = scalar_lea.vmem %s9, %s842
        $region92: #{tpu_custom_call.1} parent=83 // pred_fallthru
          _
      $region84: #{tpu_custom_call.1} parent=5 // pred_fallthru
        _
    $region6: #{tpu_custom_call.1} parent=1 // loop_footer
      %s30 = sadd.s32 1, %s26
    $region7: #{tpu_custom_call.1} parent=1 // loop_footer_branch
      %25 = sbr.rel target = $region3
    $region8: #{tpu_custom_call.1} parent=1 // loop_exit
      _
    %844 = vsyncpa [#allocation5], 1
    %s845 = scalar_lea.sflag [#allocation5], 1
    %846 = vsyncpa %s845, 1
    %847 = vsyncpa [#allocation8], 1
    %s848 = scalar_lea.sflag [#allocation8], 1
    %849 = vsyncpa %s848, 1
    %850 = vsyncpa [#allocation11], 1
    %851 = vsyncpa [#allocation6], 1
    %s852 = scalar_lea.sflag [#allocation6], 1
    %853 = vsyncpa %s852, 1

</llo_original>
